<compile_context>
chip_gen: v7x
topology: tpu7x:2x2x1
jax: 0.10.0
libtpu: 0.0.40
codegen_flags: <defaults>
</compile_context>

<pallas_src>
import functools

import jax
import jax.numpy as jnp
from jax.experimental import pallas as pl
from jax.experimental.pallas import tpu as pltpu


def _round_up(x, m):
    return (x + m - 1) // m * m


def _mfb_kernel(text_ref, img_ref, wq_ref, bq_ref, wi_ref, bi_ref, out_ref, *,
                mfb_factor):
    t = text_ref[...]          # (tile_b, K) bf16
    m = img_ref[...]           # (tile_b, K) bf16

    # Factorised bilinear pooling: per factor slice f, project on the MXU with
    # f32 accumulation, multiply on the VPU and accumulate.  Equivalent to the
    # reference sum-pool over groups of `mfb_factor` consecutive iq features,
    # but never materialises the (tile_b, mfb_out*mfb_factor) iq tensor and
    # keeps everything after the matmuls in f32.
    pooled = None
    for f in range(mfb_factor):                       # static unroll (small)
        q = jnp.dot(t, wq_ref[f], preferred_element_type=jnp.float32) + bq_ref[f]
        v = jnp.dot(m, wi_ref[f], preferred_element_type=jnp.float32) + bi_ref[f]
        qv = q * v
        pooled = qv if pooled is None else pooled + qv

    # TODO(synk): nn.Dropout(p=0.3) training-mode masking not implemented;
    # kernel matches eval()/inference behaviour (identity).

    # Signed sqrt: sqrt(relu(x)) - sqrt(relu(-x)) == sign(x) * sqrt(|x|).
    abs_p = jnp.abs(pooled)
    root = jnp.sqrt(abs_p)
    s = jnp.where(pooled >= 0.0, root, -root)

    # L2 normalise along the feature axis (F.normalize, eps=1e-12 clamp).
    # s*s == |pooled|; padded columns are exactly zero and do not contribute.
    sumsq = jnp.sum(abs_p, axis=1, keepdims=True)
    inv = jax.lax.rsqrt(jnp.maximum(sumsq, 1e-24))    # == 1 / max(||s||, 1e-12)
    out_ref[...] = (s * inv).astype(out_ref.dtype)


def mfb_baseline_forward(text_feat, img_feat, wq, bq, wi, bi, mfb_out,
                         mfb_factor, *, tile_b=128):
    """text_feat/img_feat: (B, K). wq/wi: (K, mfb_out*mfb_factor). bq/bi: (P,)."""
    B, K = text_feat.shape
    P = mfb_out * mfb_factor
    assert wq.shape == (K, P) and wi.shape == (K, P)

    out_pad = _round_up(mfb_out, 128)         # lane-dense output width

    # Batch tile: multiple of 16 (bf16 packing).  When B is big enough, make
    # sure the "parallel" batch axis has >= 2 steps so both of v7x's
    # TensorCores get work.
    tile_b = max(16, min(tile_b, _round_up(B, 16)))
    if _round_up(B, tile_b) // tile_b < 2 and B > 16:
        tile_b = _round_up(-(-B // 2), 16)
    b_pad = _round_up(B, tile_b)
    grid_b = b_pad // tile_b

    def pad_rows(x):
        return jnp.pad(x, ((0, b_pad - B), (0, 0))) if b_pad != B else x

    text_b = pad_rows(text_feat).astype(jnp.bfloat16)
    img_b = pad_rows(img_feat).astype(jnp.bfloat16)

    # Column-permute the weights into (mfb_factor, K, out_pad):
    #   w_perm[f, k, o] = w[k, o*mfb_factor + f]   (zero for o >= mfb_out)
    # so pooled[b, o] = sum_f (text @ Wq[f] + bq[f]) * (img @ Wi[f] + bi[f]).
    def permute_w(w):
        w3 = w.reshape(K, mfb_out, mfb_factor).transpose(2, 0, 1)  # (F, K, out)
        w3 = jnp.pad(w3, ((0, 0), (0, 0), (0, out_pad - mfb_out)))
        return w3.astype(jnp.bfloat16)

    def permute_b(b):
        b2 = b.reshape(mfb_out, mfb_factor).T                      # (F, out)
        b2 = jnp.pad(b2, ((0, 0), (0, out_pad - mfb_out)))
        return b2.reshape(mfb_factor, 1, out_pad).astype(jnp.float32)

    wq_p, wi_p = permute_w(wq), permute_w(wi)
    bq_p, bi_p = permute_b(bq), permute_b(bi)

    # VMEM budget from the actual allocation sizes (weights single-buffered).
    # TODO(synk): for very large mfb_out (e.g. 5000 at K=2048) the resident
    # weights alone exceed VMEM; add an output-column grid axis over
    # factor-aligned chunks plus a second lightweight normalisation pass.
    try:
        vmem_cap = pltpu.get_tpu_info().vmem_capacity_bytes
    except Exception:
        vmem_cap = 64 << 20
    needed = (2 * (2 * tile_b * K * 2)               # text+img tiles, double-buffered
              + 2 * mfb_factor * K * out_pad * 2     # Wq + Wi (bf16, single copy)
              + 2 * mfb_factor * 8 * out_pad * 4     # biases (f32, sublane-padded)
              + 2 * tile_b * out_pad * 4             # output tile, double-buffered
              + 6 * tile_b * out_pad * 4             # f32 temporaries (q, v, pooled, s)
              + 2 * tile_b * K * 2                   # loaded input values
              + (4 << 20))                           # headroom
    vmem_limit = min(int(0.9 * vmem_cap), 128 << 20, max(needed, 32 << 20))

    out_padded = pl.pallas_call(
        functools.partial(_mfb_kernel, mfb_factor=mfb_factor),
        out_shape=jax.ShapeDtypeStruct((b_pad, out_pad), jnp.float32),
        grid=(grid_b,),
        in_specs=[
            pl.BlockSpec((tile_b, K), lambda i: (i, 0)),         # text tile
            pl.BlockSpec((tile_b, K), lambda i: (i, 0)),         # img tile
            pl.BlockSpec(memory_space=pltpu.MemorySpace.VMEM),   # Wq (resident, 1 buf)
            pl.BlockSpec(memory_space=pltpu.MemorySpace.VMEM),   # bq
            pl.BlockSpec(memory_space=pltpu.MemorySpace.VMEM),   # Wi (resident, 1 buf)
            pl.BlockSpec(memory_space=pltpu.MemorySpace.VMEM),   # bi
        ],
        out_specs=pl.BlockSpec((tile_b, out_pad), lambda i: (i, 0)),
        compiler_params=pltpu.CompilerParams(
            dimension_semantics=("parallel",),
            vmem_limit_bytes=vmem_limit),
    )(text_b, img_b, wq_p, bq_p, wi_p, bi_p)

    return out_padded[:B, :mfb_out]


def _reference_f32(text_feat, img_feat, wq, bq, wi, bi, mfb_out, mfb_factor):
    # True float32 baseline (mirrors the PyTorch module in eval mode).
    ques = text_feat @ wq + bq
    img = img_feat @ wi + bi
    iq = ques * img
    pooled = iq.reshape(-1, mfb_out, mfb_factor).sum(-1)
    s = jnp.sqrt(jnp.maximum(pooled, 0.0)) - jnp.sqrt(jnp.maximum(-pooled, 0.0))
    n = jnp.sqrt(jnp.sum(s * s, axis=1, keepdims=True))
    return s / jnp.maximum(n, 1e-12)


def _reference_matched(text_feat, img_feat, wq, bq, wi, bi, mfb_out, mfb_factor):
    # Mirrors the kernel's bf16 matmul operands (isolates structural errors).
    ques = jnp.dot(text_feat.astype(jnp.bfloat16), wq.astype(jnp.bfloat16),
                   preferred_element_type=jnp.float32) + bq
    img = jnp.dot(img_feat.astype(jnp.bfloat16), wi.astype(jnp.bfloat16),
                  preferred_element_type=jnp.float32) + bi
    iq = ques * img
    pooled = iq.reshape(-1, mfb_out, mfb_factor).sum(-1)
    s = jnp.sqrt(jnp.maximum(pooled, 0.0)) - jnp.sqrt(jnp.maximum(-pooled, 0.0))
    n = jnp.sqrt(jnp.sum(s * s, axis=1, keepdims=True))
    return s / jnp.maximum(n, 1e-12)


if __name__ == "__main__":
    # Small shapes consistent with the module (both projections take im_feat_size).
    B = 8
    im_feat_size = 32
    mfb_out = 16
    mfb_factor = 5
    P = mfb_out * mfb_factor

    key = jax.random.PRNGKey(0)
    k1, k2, k3, k4, k5, k6 = jax.random.split(key, 6)

    text_feat = jax.random.normal(k1, (B, im_feat_size), dtype=jnp.float32)
    img_feat = jax.random.normal(k2, (B, im_feat_size), dtype=jnp.float32)

    # Deterministic nn.Linear-style init, stored as (in, out).
    bound = im_feat_size ** -0.5
    wq = jax.random.uniform(k3, (im_feat_size, P), jnp.float32, -bound, bound)
    bq = jax.random.uniform(k4, (P,), jnp.float32, -bound, bound)
    wi = jax.random.uniform(k5, (im_feat_size, P), jnp.float32, -bound, bound)
    bi = jax.random.uniform(k6, (P,), jnp.float32, -bound, bound)

    out = mfb_baseline_forward(text_feat, img_feat, wq, bq, wi, bi, mfb_out,
                               mfb_factor)
    out = jax.block_until_ready(out)
    assert out.shape == (B, mfb_out)

    # Tight check against a reference that mirrors the kernel's bf16 matmul
    # operands (validates the permuted-weight pooling / sqrt / normalize logic).
    ref_matched = _reference_matched(text_feat, img_feat, wq, bq, wi, bi,
                                     mfb_out, mfb_factor)
    assert jnp.allclose(out, ref_matched, atol=1e-3, rtol=1e-3), \
        "mismatch vs bf16-matched reference"

    # Looser check against the true float32 PyTorch-equivalent baseline
    # (measures bf16 operand drift).
    ref_f32 = _reference_f32(text_feat, img_feat, wq, bq, wi, bi, mfb_out,
                             mfb_factor)
    assert jnp.allclose(out, ref_f32, atol=5e-2, rtol=5e-2), \
        "mismatch vs float32 baseline"

    print("KERNEL_OK")
</pallas_src>

<mosaic_0001>
module attributes {stable_mosaic.version = 11 : i64} {
  func.func @_mfb_kernel(%arg0: i32, %arg1: memref<16x32xbf16, #tpu.memory_space<vmem>>, %arg2: memref<16x32xbf16, #tpu.memory_space<vmem>>, %arg3: memref<5x32x128xbf16, #tpu.memory_space<vmem>>, %arg4: memref<5x1x128xf32, #tpu.memory_space<vmem>>, %arg5: memref<5x32x128xbf16, #tpu.memory_space<vmem>>, %arg6: memref<5x1x128xf32, #tpu.memory_space<vmem>>, %arg7: memref<16x128xf32, #tpu.memory_space<vmem>>) attributes {dimension_semantics = [#tpu.dimension_semantics<parallel>], iteration_bounds = array<i64: 1>, scalar_prefetch = 0 : i64, scratch_operands = 0 : i64, tpu.core_type = #tpu.core_type<tc>, window_params = [{transform_indices = @transform_0, window_bounds = array<i64: 16, 32>}, {transform_indices = @transform_1, window_bounds = array<i64: 16, 32>}, {pipeline_mode = #tpu.pipeline_mode<synchronous>, transform_indices = @transform_2, window_bounds = array<i64: 5, 32, 128>}, {pipeline_mode = #tpu.pipeline_mode<synchronous>, transform_indices = @transform_3, window_bounds = array<i64: 5, 1, 128>}, {pipeline_mode = #tpu.pipeline_mode<synchronous>, transform_indices = @transform_4, window_bounds = array<i64: 5, 32, 128>}, {pipeline_mode = #tpu.pipeline_mode<synchronous>, transform_indices = @transform_5, window_bounds = array<i64: 5, 1, 128>}, {transform_indices = @transform_6, window_bounds = array<i64: 16, 128>}]} {
    %c0 = arith.constant 0 : index
    %c0_0 = arith.constant 0 : index
    %0 = vector.load %arg1[%c0, %c0_0] : memref<16x32xbf16, #tpu.memory_space<vmem>>, vector<16x32xbf16>
    %c0_1 = arith.constant 0 : index
    %c0_2 = arith.constant 0 : index
    %1 = vector.load %arg2[%c0_1, %c0_2] : memref<16x32xbf16, #tpu.memory_space<vmem>>, vector<16x32xbf16>
    %c0_3 = arith.constant 0 : index
    %c0_4 = arith.constant 0 : index
    %c0_5 = arith.constant 0 : index
    %2 = vector.load %arg3[%c0_3, %c0_4, %c0_5] : memref<5x32x128xbf16, #tpu.memory_space<vmem>>, vector<1x32x128xbf16>
    %3 = vector.shape_cast %2 : vector<1x32x128xbf16> to vector<32x128xbf16>
    %cst = arith.constant dense<0.000000e+00> : vector<16x128xf32>
    %4 = tpu.matmul %0, %3, %cst {dimension_numbers = #tpu.dot_dimension_numbers<[1], [0], [0], [1], [0, 0, 1, 1], [], []>} : vector<16x32xbf16>, vector<32x128xbf16>, vector<16x128xf32> -> vector<16x128xf32>
    %c0_6 = arith.constant 0 : index
    %c0_7 = arith.constant 0 : index
    %c0_8 = arith.constant 0 : index
    %5 = vector.load %arg4[%c0_6, %c0_7, %c0_8] : memref<5x1x128xf32, #tpu.memory_space<vmem>>, vector<1x1x128xf32>
    %6 = vector.shape_cast %5 : vector<1x1x128xf32> to vector<1x128xf32>
    %7 = vector.broadcast %6 : vector<1x128xf32> to vector<16x128xf32>
    %8 = arith.addf %4, %7 : vector<16x128xf32>
    %c0_9 = arith.constant 0 : index
    %c0_10 = arith.constant 0 : index
    %c0_11 = arith.constant 0 : index
    %9 = vector.load %arg5[%c0_9, %c0_10, %c0_11] : memref<5x32x128xbf16, #tpu.memory_space<vmem>>, vector<1x32x128xbf16>
    %10 = vector.shape_cast %9 : vector<1x32x128xbf16> to vector<32x128xbf16>
    %cst_12 = arith.constant dense<0.000000e+00> : vector<16x128xf32>
    %11 = tpu.matmul %1, %10, %cst_12 {dimension_numbers = #tpu.dot_dimension_numbers<[1], [0], [0], [1], [0, 0, 1, 1], [], []>} : vector<16x32xbf16>, vector<32x128xbf16>, vector<16x128xf32> -> vector<16x128xf32>
    %c0_13 = arith.constant 0 : index
    %c0_14 = arith.constant 0 : index
    %c0_15 = arith.constant 0 : index
    %12 = vector.load %arg6[%c0_13, %c0_14, %c0_15] : memref<5x1x128xf32, #tpu.memory_space<vmem>>, vector<1x1x128xf32>
    %13 = vector.shape_cast %12 : vector<1x1x128xf32> to vector<1x128xf32>
    %14 = vector.broadcast %13 : vector<1x128xf32> to vector<16x128xf32>
    %15 = arith.addf %11, %14 : vector<16x128xf32>
    %16 = arith.mulf %8, %15 : vector<16x128xf32>
    %c1 = arith.constant 1 : index
    %c0_16 = arith.constant 0 : index
    %c0_17 = arith.constant 0 : index
    %17 = vector.load %arg3[%c1, %c0_16, %c0_17] : memref<5x32x128xbf16, #tpu.memory_space<vmem>>, vector<1x32x128xbf16>
    %18 = vector.shape_cast %17 : vector<1x32x128xbf16> to vector<32x128xbf16>
    %cst_18 = arith.constant dense<0.000000e+00> : vector<16x128xf32>
    %19 = tpu.matmul %0, %18, %cst_18 {dimension_numbers = #tpu.dot_dimension_numbers<[1], [0], [0], [1], [0, 0, 1, 1], [], []>} : vector<16x32xbf16>, vector<32x128xbf16>, vector<16x128xf32> -> vector<16x128xf32>
    %c1_19 = arith.constant 1 : index
    %c0_20 = arith.constant 0 : index
    %c0_21 = arith.constant 0 : index
    %20 = vector.load %arg4[%c1_19, %c0_20, %c0_21] : memref<5x1x128xf32, #tpu.memory_space<vmem>>, vector<1x1x128xf32>
    %21 = vector.shape_cast %20 : vector<1x1x128xf32> to vector<1x128xf32>
    %22 = vector.broadcast %21 : vector<1x128xf32> to vector<16x128xf32>
    %23 = arith.addf %19, %22 : vector<16x128xf32>
    %c1_22 = arith.constant 1 : index
    %c0_23 = arith.constant 0 : index
    %c0_24 = arith.constant 0 : index
    %24 = vector.load %arg5[%c1_22, %c0_23, %c0_24] : memref<5x32x128xbf16, #tpu.memory_space<vmem>>, vector<1x32x128xbf16>
    %25 = vector.shape_cast %24 : vector<1x32x128xbf16> to vector<32x128xbf16>
    %cst_25 = arith.constant dense<0.000000e+00> : vector<16x128xf32>
    %26 = tpu.matmul %1, %25, %cst_25 {dimension_numbers = #tpu.dot_dimension_numbers<[1], [0], [0], [1], [0, 0, 1, 1], [], []>} : vector<16x32xbf16>, vector<32x128xbf16>, vector<16x128xf32> -> vector<16x128xf32>
    %c1_26 = arith.constant 1 : index
    %c0_27 = arith.constant 0 : index
    %c0_28 = arith.constant 0 : index
    %27 = vector.load %arg6[%c1_26, %c0_27, %c0_28] : memref<5x1x128xf32, #tpu.memory_space<vmem>>, vector<1x1x128xf32>
    %28 = vector.shape_cast %27 : vector<1x1x128xf32> to vector<1x128xf32>
    %29 = vector.broadcast %28 : vector<1x128xf32> to vector<16x128xf32>
    %30 = arith.addf %26, %29 : vector<16x128xf32>
    %31 = arith.mulf %23, %30 : vector<16x128xf32>
    %32 = arith.addf %16, %31 : vector<16x128xf32>
    %c2 = arith.constant 2 : index
    %c0_29 = arith.constant 0 : index
    %c0_30 = arith.constant 0 : index
    %33 = vector.load %arg3[%c2, %c0_29, %c0_30] : memref<5x32x128xbf16, #tpu.memory_space<vmem>>, vector<1x32x128xbf16>
    %34 = vector.shape_cast %33 : vector<1x32x128xbf16> to vector<32x128xbf16>
    %cst_31 = arith.constant dense<0.000000e+00> : vector<16x128xf32>
    %35 = tpu.matmul %0, %34, %cst_31 {dimension_numbers = #tpu.dot_dimension_numbers<[1], [0], [0], [1], [0, 0, 1, 1], [], []>} : vector<16x32xbf16>, vector<32x128xbf16>, vector<16x128xf32> -> vector<16x128xf32>
    %c2_32 = arith.constant 2 : index
    %c0_33 = arith.constant 0 : index
    %c0_34 = arith.constant 0 : index
    %36 = vector.load %arg4[%c2_32, %c0_33, %c0_34] : memref<5x1x128xf32, #tpu.memory_space<vmem>>, vector<1x1x128xf32>
    %37 = vector.shape_cast %36 : vector<1x1x128xf32> to vector<1x128xf32>
    %38 = vector.broadcast %37 : vector<1x128xf32> to vector<16x128xf32>
    %39 = arith.addf %35, %38 : vector<16x128xf32>
    %c2_35 = arith.constant 2 : index
    %c0_36 = arith.constant 0 : index
    %c0_37 = arith.constant 0 : index
    %40 = vector.load %arg5[%c2_35, %c0_36, %c0_37] : memref<5x32x128xbf16, #tpu.memory_space<vmem>>, vector<1x32x128xbf16>
    %41 = vector.shape_cast %40 : vector<1x32x128xbf16> to vector<32x128xbf16>
    %cst_38 = arith.constant dense<0.000000e+00> : vector<16x128xf32>
    %42 = tpu.matmul %1, %41, %cst_38 {dimension_numbers = #tpu.dot_dimension_numbers<[1], [0], [0], [1], [0, 0, 1, 1], [], []>} : vector<16x32xbf16>, vector<32x128xbf16>, vector<16x128xf32> -> vector<16x128xf32>
    %c2_39 = arith.constant 2 : index
    %c0_40 = arith.constant 0 : index
    %c0_41 = arith.constant 0 : index
    %43 = vector.load %arg6[%c2_39, %c0_40, %c0_41] : memref<5x1x128xf32, #tpu.memory_space<vmem>>, vector<1x1x128xf32>
    %44 = vector.shape_cast %43 : vector<1x1x128xf32> to vector<1x128xf32>
    %45 = vector.broadcast %44 : vector<1x128xf32> to vector<16x128xf32>
    %46 = arith.addf %42, %45 : vector<16x128xf32>
    %47 = arith.mulf %39, %46 : vector<16x128xf32>
    %48 = arith.addf %32, %47 : vector<16x128xf32>
    %c3 = arith.constant 3 : index
    %c0_42 = arith.constant 0 : index
    %c0_43 = arith.constant 0 : index
    %49 = vector.load %arg3[%c3, %c0_42, %c0_43] : memref<5x32x128xbf16, #tpu.memory_space<vmem>>, vector<1x32x128xbf16>
    %50 = vector.shape_cast %49 : vector<1x32x128xbf16> to vector<32x128xbf16>
    %cst_44 = arith.constant dense<0.000000e+00> : vector<16x128xf32>
    %51 = tpu.matmul %0, %50, %cst_44 {dimension_numbers = #tpu.dot_dimension_numbers<[1], [0], [0], [1], [0, 0, 1, 1], [], []>} : vector<16x32xbf16>, vector<32x128xbf16>, vector<16x128xf32> -> vector<16x128xf32>
    %c3_45 = arith.constant 3 : index
    %c0_46 = arith.constant 0 : index
    %c0_47 = arith.constant 0 : index
    %52 = vector.load %arg4[%c3_45, %c0_46, %c0_47] : memref<5x1x128xf32, #tpu.memory_space<vmem>>, vector<1x1x128xf32>
    %53 = vector.shape_cast %52 : vector<1x1x128xf32> to vector<1x128xf32>
    %54 = vector.broadcast %53 : vector<1x128xf32> to vector<16x128xf32>
    %55 = arith.addf %51, %54 : vector<16x128xf32>
    %c3_48 = arith.constant 3 : index
    %c0_49 = arith.constant 0 : index
    %c0_50 = arith.constant 0 : index
    %56 = vector.load %arg5[%c3_48, %c0_49, %c0_50] : memref<5x32x128xbf16, #tpu.memory_space<vmem>>, vector<1x32x128xbf16>
    %57 = vector.shape_cast %56 : vector<1x32x128xbf16> to vector<32x128xbf16>
    %cst_51 = arith.constant dense<0.000000e+00> : vector<16x128xf32>
    %58 = tpu.matmul %1, %57, %cst_51 {dimension_numbers = #tpu.dot_dimension_numbers<[1], [0], [0], [1], [0, 0, 1, 1], [], []>} : vector<16x32xbf16>, vector<32x128xbf16>, vector<16x128xf32> -> vector<16x128xf32>
    %c3_52 = arith.constant 3 : index
    %c0_53 = arith.constant 0 : index
    %c0_54 = arith.constant 0 : index
    %59 = vector.load %arg6[%c3_52, %c0_53, %c0_54] : memref<5x1x128xf32, #tpu.memory_space<vmem>>, vector<1x1x128xf32>
    %60 = vector.shape_cast %59 : vector<1x1x128xf32> to vector<1x128xf32>
    %61 = vector.broadcast %60 : vector<1x128xf32> to vector<16x128xf32>
    %62 = arith.addf %58, %61 : vector<16x128xf32>
    %63 = arith.mulf %55, %62 : vector<16x128xf32>
    %64 = arith.addf %48, %63 : vector<16x128xf32>
    %c4 = arith.constant 4 : index
    %c0_55 = arith.constant 0 : index
    %c0_56 = arith.constant 0 : index
    %65 = vector.load %arg3[%c4, %c0_55, %c0_56] : memref<5x32x128xbf16, #tpu.memory_space<vmem>>, vector<1x32x128xbf16>
    %66 = vector.shape_cast %65 : vector<1x32x128xbf16> to vector<32x128xbf16>
    %cst_57 = arith.constant dense<0.000000e+00> : vector<16x128xf32>
    %67 = tpu.matmul %0, %66, %cst_57 {dimension_numbers = #tpu.dot_dimension_numbers<[1], [0], [0], [1], [0, 0, 1, 1], [], []>} : vector<16x32xbf16>, vector<32x128xbf16>, vector<16x128xf32> -> vector<16x128xf32>
    %c4_58 = arith.constant 4 : index
    %c0_59 = arith.constant 0 : index
    %c0_60 = arith.constant 0 : index
    %68 = vector.load %arg4[%c4_58, %c0_59, %c0_60] : memref<5x1x128xf32, #tpu.memory_space<vmem>>, vector<1x1x128xf32>
    %69 = vector.shape_cast %68 : vector<1x1x128xf32> to vector<1x128xf32>
    %70 = vector.broadcast %69 : vector<1x128xf32> to vector<16x128xf32>
    %71 = arith.addf %67, %70 : vector<16x128xf32>
    %c4_61 = arith.constant 4 : index
    %c0_62 = arith.constant 0 : index
    %c0_63 = arith.constant 0 : index
    %72 = vector.load %arg5[%c4_61, %c0_62, %c0_63] : memref<5x32x128xbf16, #tpu.memory_space<vmem>>, vector<1x32x128xbf16>
    %73 = vector.shape_cast %72 : vector<1x32x128xbf16> to vector<32x128xbf16>
    %cst_64 = arith.constant dense<0.000000e+00> : vector<16x128xf32>
    %74 = tpu.matmul %1, %73, %cst_64 {dimension_numbers = #tpu.dot_dimension_numbers<[1], [0], [0], [1], [0, 0, 1, 1], [], []>} : vector<16x32xbf16>, vector<32x128xbf16>, vector<16x128xf32> -> vector<16x128xf32>
    %c4_65 = arith.constant 4 : index
    %c0_66 = arith.constant 0 : index
    %c0_67 = arith.constant 0 : index
    %75 = vector.load %arg6[%c4_65, %c0_66, %c0_67] : memref<5x1x128xf32, #tpu.memory_space<vmem>>, vector<1x1x128xf32>
    %76 = vector.shape_cast %75 : vector<1x1x128xf32> to vector<1x128xf32>
    %77 = vector.broadcast %76 : vector<1x128xf32> to vector<16x128xf32>
    %78 = arith.addf %74, %77 : vector<16x128xf32>
    %79 = arith.mulf %71, %78 : vector<16x128xf32>
    %80 = arith.addf %64, %79 : vector<16x128xf32>
    %81 = math.absf %80 : vector<16x128xf32>
    %82 = math.sqrt %81 : vector<16x128xf32>
    %cst_68 = arith.constant 0.000000e+00 : f32
    %83 = vector.broadcast %cst_68 : f32 to vector<16x128xf32>
    %84 = arith.cmpf oge, %80, %83 : vector<16x128xf32>
    %cst_69 = arith.constant 0.000000e+00 : f32
    %85 = vector.broadcast %cst_69 : f32 to vector<16x128xf32>
    %86 = arith.subf %85, %82 : vector<16x128xf32>
    %87 = arith.select %84, %82, %86 : vector<16x128xi1>, vector<16x128xf32>
    %cst_70 = arith.constant dense<0.000000e+00> : vector<16xf32>
    %88 = vector.multi_reduction <add>, %81, %cst_70 [1] : vector<16x128xf32> to vector<16xf32>
    %89 = vector.shape_cast %88 : vector<16xf32> to vector<16x1xf32>
    %cst_71 = arith.constant 1.000000e-24 : f32
    %90 = vector.broadcast %cst_71 : f32 to vector<16x1xf32>
    %91 = arith.maximumf %89, %90 : vector<16x1xf32>
    %92 = math.rsqrt %91 : vector<16x1xf32>
    %93 = vector.broadcast %92 : vector<16x1xf32> to vector<16x128xf32>
    %94 = arith.mulf %87, %93 : vector<16x128xf32>
    %c0_72 = arith.constant 0 : index
    %c0_73 = arith.constant 0 : index
    %95 = vector.load %arg7[%c0_72, %c0_73] : memref<16x128xf32, #tpu.memory_space<vmem>>, vector<16x128xf32>
    tpu.vector_store %arg7[%c0_72, %c0_73], %94 {strides = array<i32>} : memref<16x128xf32, #tpu.memory_space<vmem>>, vector<16x128xf32>,
    return
  }
  func.func @transform_0(%arg0: i32) -> (i32, i32) {
    %c0_i32 = arith.constant 0 : i32
    %c0_i32_0 = arith.constant 0 : i32
    return %arg0, %c0_i32 : i32, i32
  }
  func.func @transform_1(%arg0: i32) -> (i32, i32) {
    %c0_i32 = arith.constant 0 : i32
    %c0_i32_0 = arith.constant 0 : i32
    return %arg0, %c0_i32 : i32, i32
  }
  func.func @transform_2(%arg0: i32) -> (i32, i32, i32) {
    %c0_i32 = arith.constant 0 : i32
    %c0_i32_0 = arith.constant 0 : i32
    %c0_i32_1 = arith.constant 0 : i32
    %c0_i32_2 = arith.constant 0 : i32
    return %c0_i32, %c0_i32_0, %c0_i32_1 : i32, i32, i32
  }
  func.func @transform_3(%arg0: i32) -> (i32, i32, i32) {
    %c0_i32 = arith.constant 0 : i32
    %c0_i32_0 = arith.constant 0 : i32
    %c0_i32_1 = arith.constant 0 : i32
    %c0_i32_2 = arith.constant 0 : i32
    return %c0_i32, %c0_i32_0, %c0_i32_1 : i32, i32, i32
  }
  func.func @transform_4(%arg0: i32) -> (i32, i32, i32) {
    %c0_i32 = arith.constant 0 : i32
    %c0_i32_0 = arith.constant 0 : i32
    %c0_i32_1 = arith.constant 0 : i32
    %c0_i32_2 = arith.constant 0 : i32
    return %c0_i32, %c0_i32_0, %c0_i32_1 : i32, i32, i32
  }
  func.func @transform_5(%arg0: i32) -> (i32, i32, i32) {
    %c0_i32 = arith.constant 0 : i32
    %c0_i32_0 = arith.constant 0 : i32
    %c0_i32_1 = arith.constant 0 : i32
    %c0_i32_2 = arith.constant 0 : i32
    return %c0_i32, %c0_i32_0, %c0_i32_1 : i32, i32, i32
  }
  func.func @transform_6(%arg0: i32) -> (i32, i32) {
    %c0_i32 = arith.constant 0 : i32
    %c0_i32_0 = arith.constant 0 : i32
    return %arg0, %c0_i32 : i32, i32
  }
}

</mosaic_0001>

<llo_original>
// kernel: tpu_custom_call.1
$region0: #{tpu_custom_call.1}
  #allocation0 [shape = 'u32[]', space=smem, size = 0x4, offset = 0x4, fixed_abs, tag = 'smem constant byte address 0x4 - core index']
  #allocation1 [shape = 'u32[144,128]{1,0:T(1,128)}', space=vmem, size = 0x12000, scoped, tag = 'internal scratch']
  %s0 = inlined_call_operand.hbm [shape: bf16[16,32], index: 0, kind: input, shape index: {}]
  %s1 = inlined_call_operand.hbm [shape: bf16[16,32], index: 1, kind: input, shape index: {}]
  %s2 = inlined_call_operand.hbm [shape: bf16[5,32,128], index: 2, kind: input, shape index: {}]
  %s3 = inlined_call_operand.vmem [shape: f32[5,1,128], index: 3, kind: input, shape index: {}]
  %s4 = inlined_call_operand.hbm [shape: bf16[5,32,128], index: 4, kind: input, shape index: {}]
  %s5 = inlined_call_operand.vmem [shape: f32[5,1,128], index: 5, kind: input, shape index: {}]
  %s6 = inlined_call_operand.hbm [shape: f32[16,128], index: 6, kind: output, shape index: {}]
  %s7 = sld [smem:[#allocation0]]
  $region50: #{tpu_custom_call.1} parent=0
    _
  %s9 = ssub.s32 1, %s7
  %s10 = scalar_select 0, %s9, %s7
  $region1: #{tpu_custom_call.1} parent=0
    #allocation2 [shape = 'u8[4096]{0}', space=vmem, size = 0x1000, scoped, tag = 'input window, operand 0, single buffered']
    #allocation3 [shape = 's32[1]{0}', space=sflag, size = 0x4, scoped, tag = 'scoped memory for tpu_custom_call.1']
    #allocation4 [shape = 's32[1]{0}', space=sflag, size = 0x4, scoped, tag = 'scoped memory for tpu_custom_call.1']
    #allocation5 [shape = 'u8[4096]{0}', space=vmem, size = 0x1000, scoped, tag = 'input window, operand 1, single buffered']
    #allocation6 [shape = 's32[1]{0}', space=sflag, size = 0x4, scoped, tag = 'scoped memory for tpu_custom_call.1']
    #allocation7 [shape = 'u8[40960]{0}', space=vmem, size = 0xa000, scoped, tag = 'input window, operand 2, single buffered']
    #allocation8 [shape = 'u8[40960]{0}', space=vmem, size = 0xa000, scoped, tag = 'input window, operand 4, single buffered']
    #allocation9 [shape = 's32[1]{0}', space=sflag, size = 0x4, scoped, tag = 'scoped memory for tpu_custom_call.1']
    #allocation10 [shape = 'u8[8192]{0}', space=vmem, size = 0x2000, scoped, tag = 'output window, operand 0, single buffered']
    %11 = vsyncpa [#allocation3], 0
    %12 = vsyncpa [#allocation6], 0
    %13 = vsyncpa [#allocation9], 0
    %14 = vsyncpa [#allocation4], 0
    // Predicated region
    $region2: #{tpu_custom_call.1} parent=1 // pred_check
      _
    $region3: #{tpu_custom_call.1} parent=1 // pred_check_branch
      %16 = sbr.rel (0) target = $region5
    $region4: #{tpu_custom_call.1} parent=1 // pred_region
      %s18 = ssub.s32 128, 128
      %19 = vsyncadd [#allocation3], %s18
      %s20 = sshll.u32 [#allocation2], 4
      %s21 = int_to_ptr.vmem [resolvable:$true] %s20
      %26 = dma.hbm_to_vmem [thread:$0]  %s0, 128, %s21, [#allocation3], 64, 64, 4
    $region5: #{tpu_custom_call.1} parent=1 // pred_fallthru
      _
    // Predicated region
    $region6: #{tpu_custom_call.1} parent=1 // pred_check
      _
    $region7: #{tpu_custom_call.1} parent=1 // pred_check_branch
      %28 = sbr.rel (0) target = $region9
    $region8: #{tpu_custom_call.1} parent=1 // pred_region
      %s30 = ssub.s32 128, 128
      %31 = vsyncadd [#allocation6], %s30
      %s32 = sshll.u32 [#allocation5], 4
      %s33 = int_to_ptr.vmem [resolvable:$true] %s32
      %38 = dma.hbm_to_vmem [thread:$0]  %s1, 128, %s33, [#allocation6], 64, 64, 4
    $region9: #{tpu_custom_call.1} parent=1 // pred_fallthru
      _
    // Predicated region
    $region10: #{tpu_custom_call.1} parent=1 // pred_check
      _
    $region11: #{tpu_custom_call.1} parent=1 // pred_check_branch
      %40 = sbr.rel (0) target = $region13
    $region12: #{tpu_custom_call.1} parent=1 // pred_region
      %s42 = ssub.s32 1280, 1280
      %43 = vsyncadd [#allocation6], %s42
      %s44 = sshll.u32 [#allocation7], 4
      %s45 = int_to_ptr.vmem [resolvable:$true] %s44
      %50 = dma.hbm_to_vmem [thread:$0]  %s2, 1280, %s45, [#allocation6], 64, 64, 4
    $region13: #{tpu_custom_call.1} parent=1 // pred_fallthru
      _
    // Predicated region
    $region14: #{tpu_custom_call.1} parent=1 // pred_check
      _
    $region15: #{tpu_custom_call.1} parent=1 // pred_check_branch
      %52 = sbr.rel (0) target = $region17
    $region16: #{tpu_custom_call.1} parent=1 // pred_region
      _
    $region17: #{tpu_custom_call.1} parent=1 // pred_fallthru
      _
    // Predicated region
    $region18: #{tpu_custom_call.1} parent=1 // pred_check
      _
    $region19: #{tpu_custom_call.1} parent=1 // pred_check_branch
      %54 = sbr.rel (0) target = $region21
    $region20: #{tpu_custom_call.1} parent=1 // pred_region
      %s56 = ssub.s32 1280, 1280
      %57 = vsyncadd [#allocation9], %s56
      %s58 = sshll.u32 [#allocation8], 4
      %s59 = int_to_ptr.vmem [resolvable:$true] %s58
      %64 = dma.hbm_to_vmem [thread:$0]  %s4, 1280, %s59, [#allocation9], 64, 64, 4
    $region21: #{tpu_custom_call.1} parent=1 // pred_fallthru
      _
    // Predicated region
    $region22: #{tpu_custom_call.1} parent=1 // pred_check
      _
    $region23: #{tpu_custom_call.1} parent=1 // pred_check_branch
      %66 = sbr.rel (0) target = $region25
    $region24: #{tpu_custom_call.1} parent=1 // pred_region
      _
    $region25: #{tpu_custom_call.1} parent=1 // pred_fallthru
      _
    // Predicated region
    $region26: #{tpu_custom_call.1} parent=1 // pred_check
      _
    $region27: #{tpu_custom_call.1} parent=1 // pred_check_branch
      %68 = sbr.rel (0) target = $region29
    $region28: #{tpu_custom_call.1} parent=1 // pred_region
      %69 = dma.done [#allocation3], 128
    $region29: #{tpu_custom_call.1} parent=1 // pred_fallthru
      _
    // Predicated region
    $region30: #{tpu_custom_call.1} parent=1 // pred_check
      _
    $region31: #{tpu_custom_call.1} parent=1 // pred_check_branch
      %71 = sbr.rel (0) target = $region33
    $region32: #{tpu_custom_call.1} parent=1 // pred_region
      %72 = dma.done [#allocation6], 128
    $region33: #{tpu_custom_call.1} parent=1 // pred_fallthru
      _
    // Predicated region
    $region34: #{tpu_custom_call.1} parent=1 // pred_check
      _
    $region35: #{tpu_custom_call.1} parent=1 // pred_check_branch
      %74 = sbr.rel (0) target = $region37
    $region36: #{tpu_custom_call.1} parent=1 // pred_region
      %75 = dma.done [#allocation6], 1280
    $region37: #{tpu_custom_call.1} parent=1 // pred_fallthru
      _
    // Predicated region
    $region38: #{tpu_custom_call.1} parent=1 // pred_check
      _
    $region39: #{tpu_custom_call.1} parent=1 // pred_check_branch
      %77 = sbr.rel (0) target = $region41
    $region40: #{tpu_custom_call.1} parent=1 // pred_region
      %78 = dma.done [#allocation9], 1280
    $region41: #{tpu_custom_call.1} parent=1 // pred_fallthru
      _
    %v80 = vld [vmem:[#allocation2] sm:$0xf]
    %v81 = vld [vmem:[#allocation2 + $0x4] sm:$0xf]
    %v82 = vld [vmem:[#allocation5] sm:$0xf]
    %v83 = vld [vmem:[#allocation5 + $0x4] sm:$0xf]
    %v84 = vld [vmem:[#allocation7] sm:$0xf]
    %v85 = vld [vmem:[#allocation7 + $0x4] sm:$0xf]
    %v86 = vld [vmem:[#allocation7 + $0x8] sm:$0xf]
    %v87 = vld [vmem:[#allocation7 + $0xc] sm:$0xf]
    %v88 = vld [vmem:[%s3] sm:$0x1]
    %v90 = vlaneseq
    %v91 = vshrl.u32 %v90, 7
    %v92 = vsub.s32 0, %v91
    %v93 = vrot.slane %v88, %v92
    %v97 = vunpack.c.l.b16 %v80
    %v98 = vunpack.c.l.b16 %v81
    %v99 = vpack.c.b16 %v98, %v97
    %v104 = vunpack.c.l.b16 %v84
    %v105 = vunpack.c.l.b16 %v85
    %v106 = vunpack.c.l.b16 %v86
    %v107 = vunpack.c.l.b16 %v87
    %v108 = vpack.c.b16 %v105, %v104
    %v109 = vpack.c.b16 %v107, %v106
    %vm112 = vcmask 261120
    %v114 = vsel %vm112, %v99, 0
    %116 = vmatprep.subr.bf16.mxu0 0
    %117 = vmatpush1.bf16.msra.mxu0 %v108
    %118 = vmatprep.subr.bf16.mxu0 0
    %119 = vmatpush1.bf16.msra.mxu0 %v109
    %120 = vmatprep.subr.bf16.mxu0 0
    %121 = vmatpush1.bf16.msra.mxu0 0
    %122 = vmatprep.subr.bf16.mxu0 0
    %123 = vmatpush1.bf16.msra.mxu0 0
    %124 = vmatprep.subr.bf16.mxu0 0
    %125 = vmatpush1.bf16.msra.mxu0 0
    %126 = vmatprep.subr.bf16.mxu0 0
    %127 = vmatpush1.bf16.msra.mxu0 0
    %128 = vmatprep.subr.bf16.mxu0 0
    %129 = vmatpush1.bf16.msra.mxu0 0
    %130 = vmatprep.subr.bf16.mxu0 0
    %131 = vmatpush1.bf16.msra.mxu0 0
    %132 = vmatprep.subr.bf16.mxu0 0
    %133 = vmatpush1.bf16.msra.mxu0 0
    %134 = vmatprep.subr.bf16.mxu0 0
    %135 = vmatpush1.bf16.msra.mxu0 0
    %136 = vmatprep.subr.bf16.mxu0 0
    %137 = vmatpush1.bf16.msra.mxu0 0
    %138 = vmatprep.subr.bf16.mxu0 0
    %139 = vmatpush1.bf16.msra.mxu0 0
    %140 = vmatprep.subr.bf16.mxu0 0
    %141 = vmatpush1.bf16.msra.mxu0 0
    %142 = vmatprep.subr.bf16.mxu0 0
    %143 = vmatpush1.bf16.msra.mxu0 0
    %144 = vmatprep.subr.bf16.mxu0 0
    %145 = vmatpush1.bf16.msra.mxu0 0
    %146 = vmatprep.subr.bf16.mxu0 0
    %147 = vmatpush1.bf16.msra.mxu0 0
    %148 = vmatprep.mubr.bf16.mxu0 0
    %149 = vmatmul.mubr.bf16.gmra.mrb[0].mxu0 %v114
    %v150 = vpop.f32.mrb[0].mxu0
    %v151 = vadd.f32 %v93, %v150
    %v152 = vpop.f32.mrb[0].mxu0
    %v153 = vpop.f32.mrb[0].mxu0
    %v154 = vadd.f32 %v93, %v153
    %v155 = vpop.f32.mrb[0].mxu0
    %156 = vdwg.mxu0
    %v157 = vld [vmem:[#allocation8] sm:$0xf]
    %v158 = vld [vmem:[#allocation8 + $0x4] sm:$0xf]
    %v159 = vld [vmem:[#allocation8 + $0x8] sm:$0xf]
    %v160 = vld [vmem:[#allocation8 + $0xc] sm:$0xf]
    %v161 = vld [vmem:[%s5] sm:$0x1]
    %v163 = vlaneseq
    %v164 = vshrl.u32 %v163, 7
    %v165 = vsub.s32 0, %v164
    %v166 = vrot.slane %v161, %v165
    %v170 = vunpack.c.l.b16 %v82
    %v171 = vunpack.c.l.b16 %v83
    %v172 = vpack.c.b16 %v171, %v170
    %v177 = vunpack.c.l.b16 %v157
    %v178 = vunpack.c.l.b16 %v158
    %v179 = vunpack.c.l.b16 %v159
    %v180 = vunpack.c.l.b16 %v160
    %v181 = vpack.c.b16 %v178, %v177
    %v182 = vpack.c.b16 %v180, %v179
    %v186 = vsel %vm112, %v172, 0
    %188 = vmatprep.subr.bf16.mxu0 0
    %189 = vmatpush1.bf16.msra.mxu0 %v181
    %190 = vmatprep.subr.bf16.mxu0 0
    %191 = vmatpush1.bf16.msra.mxu0 %v182
    %192 = vmatprep.subr.bf16.mxu0 0
    %193 = vmatpush1.bf16.msra.mxu0 0
    %194 = vmatprep.subr.bf16.mxu0 0
    %195 = vmatpush1.bf16.msra.mxu0 0
    %196 = vmatprep.subr.bf16.mxu0 0
    %197 = vmatpush1.bf16.msra.mxu0 0
    %198 = vmatprep.subr.bf16.mxu0 0
    %199 = vmatpush1.bf16.msra.mxu0 0
    %200 = vmatprep.subr.bf16.mxu0 0
    %201 = vmatpush1.bf16.msra.mxu0 0
    %202 = vmatprep.subr.bf16.mxu0 0
    %203 = vmatpush1.bf16.msra.mxu0 0
    %204 = vmatprep.subr.bf16.mxu0 0
    %205 = vmatpush1.bf16.msra.mxu0 0
    %206 = vmatprep.subr.bf16.mxu0 0
    %207 = vmatpush1.bf16.msra.mxu0 0
    %208 = vmatprep.subr.bf16.mxu0 0
    %209 = vmatpush1.bf16.msra.mxu0 0
    %210 = vmatprep.subr.bf16.mxu0 0
    %211 = vmatpush1.bf16.msra.mxu0 0
    %212 = vmatprep.subr.bf16.mxu0 0
    %213 = vmatpush1.bf16.msra.mxu0 0
    %214 = vmatprep.subr.bf16.mxu0 0
    %215 = vmatpush1.bf16.msra.mxu0 0
    %216 = vmatprep.subr.bf16.mxu0 0
    %217 = vmatpush1.bf16.msra.mxu0 0
    %218 = vmatprep.subr.bf16.mxu0 0
    %219 = vmatpush1.bf16.msra.mxu0 0
    %220 = vmatprep.mubr.bf16.mxu0 0
    %221 = vmatmul.mubr.bf16.gmra.mrb[0].mxu0 %v186
    %v222 = vpop.f32.mrb[0].mxu0
    %v223 = vadd.f32 %v166, %v222
    %v224 = vpop.f32.mrb[0].mxu0
    %v225 = vpop.f32.mrb[0].mxu0
    %v226 = vadd.f32 %v166, %v225
    %v227 = vpop.f32.mrb[0].mxu0
    %228 = vdwg.mxu0
    %v229 = vmul.f32 %v151, %v223
    %v230 = vmul.f32 %v154, %v226
    %s231 = scalar_lea.vmem [#allocation7], 16
    %v232 = vld [vmem:[%s231] sm:$0xf]
    %v233 = vld [vmem:[%s231 + $0x4] sm:$0xf]
    %v234 = vld [vmem:[%s231 + $0x8] sm:$0xf]
    %v235 = vld [vmem:[%s231 + $0xc] sm:$0xf]
    %s236 = scalar_lea.vmem %s3, 1
    %v237 = vld [vmem:[%s236] sm:$0x1]
    %v239 = vlaneseq
    %v240 = vshrl.u32 %v239, 7
    %v241 = vsub.s32 0, %v240
    %v242 = vrot.slane %v237, %v241
    %v248 = vunpack.c.l.b16 %v232
    %v249 = vunpack.c.l.b16 %v233
    %v250 = vunpack.c.l.b16 %v234
    %v251 = vunpack.c.l.b16 %v235
    %v252 = vpack.c.b16 %v249, %v248
    %v253 = vpack.c.b16 %v251, %v250
    %256 = vmatprep.subr.bf16.mxu0 0
    %257 = vmatpush1.bf16.msra.mxu0 %v252
    %258 = vmatprep.subr.bf16.mxu0 0
    %259 = vmatpush1.bf16.msra.mxu0 %v253
    %260 = vmatprep.subr.bf16.mxu0 0
    %261 = vmatpush1.bf16.msra.mxu0 0
    %262 = vmatprep.subr.bf16.mxu0 0
    %263 = vmatpush1.bf16.msra.mxu0 0
    %264 = vmatprep.subr.bf16.mxu0 0
    %265 = vmatpush1.bf16.msra.mxu0 0
    %266 = vmatprep.subr.bf16.mxu0 0
    %267 = vmatpush1.bf16.msra.mxu0 0
    %268 = vmatprep.subr.bf16.mxu0 0
    %269 = vmatpush1.bf16.msra.mxu0 0
    %270 = vmatprep.subr.bf16.mxu0 0
    %271 = vmatpush1.bf16.msra.mxu0 0
    %272 = vmatprep.subr.bf16.mxu0 0
    %273 = vmatpush1.bf16.msra.mxu0 0
    %274 = vmatprep.subr.bf16.mxu0 0
    %275 = vmatpush1.bf16.msra.mxu0 0
    %276 = vmatprep.subr.bf16.mxu0 0
    %277 = vmatpush1.bf16.msra.mxu0 0
    %278 = vmatprep.subr.bf16.mxu0 0
    %279 = vmatpush1.bf16.msra.mxu0 0
    %280 = vmatprep.subr.bf16.mxu0 0
    %281 = vmatpush1.bf16.msra.mxu0 0
    %282 = vmatprep.subr.bf16.mxu0 0
    %283 = vmatpush1.bf16.msra.mxu0 0
    %284 = vmatprep.subr.bf16.mxu0 0
    %285 = vmatpush1.bf16.msra.mxu0 0
    %286 = vmatprep.subr.bf16.mxu0 0
    %287 = vmatpush1.bf16.msra.mxu0 0
    %288 = vmatprep.mubr.bf16.mxu0 0
    %289 = vmatmul.mubr.bf16.gmra.mrb[0].mxu0 %v114
    %v290 = vpop.f32.mrb[0].mxu0
    %v291 = vadd.f32 %v242, %v290
    %v292 = vpop.f32.mrb[0].mxu0
    %v293 = vpop.f32.mrb[0].mxu0
    %v294 = vadd.f32 %v242, %v293
    %v295 = vpop.f32.mrb[0].mxu0
    %296 = vdwg.mxu0
    %s297 = scalar_lea.vmem [#allocation8], 16
    %v298 = vld [vmem:[%s297] sm:$0xf]
    %v299 = vld [vmem:[%s297 + $0x4] sm:$0xf]
    %v300 = vld [vmem:[%s297 + $0x8] sm:$0xf]
    %v301 = vld [vmem:[%s297 + $0xc] sm:$0xf]
    %s302 = scalar_lea.vmem %s5, 1
    %v303 = vld [vmem:[%s302] sm:$0x1]
    %v305 = vlaneseq
    %v306 = vshrl.u32 %v305, 7
    %v307 = vsub.s32 0, %v306
    %v308 = vrot.slane %v303, %v307
    %v314 = vunpack.c.l.b16 %v298
    %v315 = vunpack.c.l.b16 %v299
    %v316 = vunpack.c.l.b16 %v300
    %v317 = vunpack.c.l.b16 %v301
    %v318 = vpack.c.b16 %v315, %v314
    %v319 = vpack.c.b16 %v317, %v316
    %322 = vmatprep.subr.bf16.mxu0 0
    %323 = vmatpush1.bf16.msra.mxu0 %v318
    %324 = vmatprep.subr.bf16.mxu0 0
    %325 = vmatpush1.bf16.msra.mxu0 %v319
    %326 = vmatprep.subr.bf16.mxu0 0
    %327 = vmatpush1.bf16.msra.mxu0 0
    %328 = vmatprep.subr.bf16.mxu0 0
    %329 = vmatpush1.bf16.msra.mxu0 0
    %330 = vmatprep.subr.bf16.mxu0 0
    %331 = vmatpush1.bf16.msra.mxu0 0
    %332 = vmatprep.subr.bf16.mxu0 0
    %333 = vmatpush1.bf16.msra.mxu0 0
    %334 = vmatprep.subr.bf16.mxu0 0
    %335 = vmatpush1.bf16.msra.mxu0 0
    %336 = vmatprep.subr.bf16.mxu0 0
    %337 = vmatpush1.bf16.msra.mxu0 0
    %338 = vmatprep.subr.bf16.mxu0 0
    %339 = vmatpush1.bf16.msra.mxu0 0
    %340 = vmatprep.subr.bf16.mxu0 0
    %341 = vmatpush1.bf16.msra.mxu0 0
    %342 = vmatprep.subr.bf16.mxu0 0
    %343 = vmatpush1.bf16.msra.mxu0 0
    %344 = vmatprep.subr.bf16.mxu0 0
    %345 = vmatpush1.bf16.msra.mxu0 0
    %346 = vmatprep.subr.bf16.mxu0 0
    %347 = vmatpush1.bf16.msra.mxu0 0
    %348 = vmatprep.subr.bf16.mxu0 0
    %349 = vmatpush1.bf16.msra.mxu0 0
    %350 = vmatprep.subr.bf16.mxu0 0
    %351 = vmatpush1.bf16.msra.mxu0 0
    %352 = vmatprep.subr.bf16.mxu0 0
    %353 = vmatpush1.bf16.msra.mxu0 0
    %354 = vmatprep.mubr.bf16.mxu0 0
    %355 = vmatmul.mubr.bf16.gmra.mrb[0].mxu0 %v186
    %v356 = vpop.f32.mrb[0].mxu0
    %v357 = vadd.f32 %v308, %v356
    %v358 = vpop.f32.mrb[0].mxu0
    %v359 = vpop.f32.mrb[0].mxu0
    %v360 = vadd.f32 %v308, %v359
    %v361 = vpop.f32.mrb[0].mxu0
    %362 = vdwg.mxu0
    %v363 = vmul.f32 %v291, %v357
    %v364 = vmul.f32 %v294, %v360
    %v365 = vadd.f32 %v229, %v363
    %v366 = vadd.f32 %v230, %v364
    %s367 = scalar_lea.vmem [#allocation7], 32
    %v368 = vld [vmem:[%s367] sm:$0xf]
    %v369 = vld [vmem:[%s367 + $0x4] sm:$0xf]
    %v370 = vld [vmem:[%s367 + $0x8] sm:$0xf]
    %v371 = vld [vmem:[%s367 + $0xc] sm:$0xf]
    %s372 = scalar_lea.vmem %s3, 2
    %v373 = vld [vmem:[%s372] sm:$0x1]
    %v375 = vlaneseq
    %v376 = vshrl.u32 %v375, 7
    %v377 = vsub.s32 0, %v376
    %v378 = vrot.slane %v373, %v377
    %v384 = vunpack.c.l.b16 %v368
    %v385 = vunpack.c.l.b16 %v369
    %v386 = vunpack.c.l.b16 %v370
    %v387 = vunpack.c.l.b16 %v371
    %v388 = vpack.c.b16 %v385, %v384
    %v389 = vpack.c.b16 %v387, %v386
    %392 = vmatprep.subr.bf16.mxu0 0
    %393 = vmatpush1.bf16.msra.mxu0 %v388
    %394 = vmatprep.subr.bf16.mxu0 0
    %395 = vmatpush1.bf16.msra.mxu0 %v389
    %396 = vmatprep.subr.bf16.mxu0 0
    %397 = vmatpush1.bf16.msra.mxu0 0
    %398 = vmatprep.subr.bf16.mxu0 0
    %399 = vmatpush1.bf16.msra.mxu0 0
    %400 = vmatprep.subr.bf16.mxu0 0
    %401 = vmatpush1.bf16.msra.mxu0 0
    %402 = vmatprep.subr.bf16.mxu0 0
    %403 = vmatpush1.bf16.msra.mxu0 0
    %404 = vmatprep.subr.bf16.mxu0 0
    %405 = vmatpush1.bf16.msra.mxu0 0
    %406 = vmatprep.subr.bf16.mxu0 0
    %407 = vmatpush1.bf16.msra.mxu0 0
    %408 = vmatprep.subr.bf16.mxu0 0
    %409 = vmatpush1.bf16.msra.mxu0 0
    %410 = vmatprep.subr.bf16.mxu0 0
    %411 = vmatpush1.bf16.msra.mxu0 0
    %412 = vmatprep.subr.bf16.mxu0 0
    %413 = vmatpush1.bf16.msra.mxu0 0
    %414 = vmatprep.subr.bf16.mxu0 0
    %415 = vmatpush1.bf16.msra.mxu0 0
    %416 = vmatprep.subr.bf16.mxu0 0
    %417 = vmatpush1.bf16.msra.mxu0 0
    %418 = vmatprep.subr.bf16.mxu0 0
    %419 = vmatpush1.bf16.msra.mxu0 0
    %420 = vmatprep.subr.bf16.mxu0 0
    %421 = vmatpush1.bf16.msra.mxu0 0
    %422 = vmatprep.subr.bf16.mxu0 0
    %423 = vmatpush1.bf16.msra.mxu0 0
    %424 = vmatprep.mubr.bf16.mxu0 0
    %425 = vmatmul.mubr.bf16.gmra.mrb[0].mxu0 %v114
    %v426 = vpop.f32.mrb[0].mxu0
    %v427 = vadd.f32 %v378, %v426
    %v428 = vpop.f32.mrb[0].mxu0
    %v429 = vpop.f32.mrb[0].mxu0
    %v430 = vadd.f32 %v378, %v429
    %v431 = vpop.f32.mrb[0].mxu0
    %432 = vdwg.mxu0
    %s433 = scalar_lea.vmem [#allocation8], 32
    %v434 = vld [vmem:[%s433] sm:$0xf]
    %v435 = vld [vmem:[%s433 + $0x4] sm:$0xf]
    %v436 = vld [vmem:[%s433 + $0x8] sm:$0xf]
    %v437 = vld [vmem:[%s433 + $0xc] sm:$0xf]
    %s438 = scalar_lea.vmem %s5, 2
    %v439 = vld [vmem:[%s438] sm:$0x1]
    %v441 = vlaneseq
    %v442 = vshrl.u32 %v441, 7
    %v443 = vsub.s32 0, %v442
    %v444 = vrot.slane %v439, %v443
    %v450 = vunpack.c.l.b16 %v434
    %v451 = vunpack.c.l.b16 %v435
    %v452 = vunpack.c.l.b16 %v436
    %v453 = vunpack.c.l.b16 %v437
    %v454 = vpack.c.b16 %v451, %v450
    %v455 = vpack.c.b16 %v453, %v452
    %458 = vmatprep.subr.bf16.mxu0 0
    %459 = vmatpush1.bf16.msra.mxu0 %v454
    %460 = vmatprep.subr.bf16.mxu0 0
    %461 = vmatpush1.bf16.msra.mxu0 %v455
    %462 = vmatprep.subr.bf16.mxu0 0
    %463 = vmatpush1.bf16.msra.mxu0 0
    %464 = vmatprep.subr.bf16.mxu0 0
    %465 = vmatpush1.bf16.msra.mxu0 0
    %466 = vmatprep.subr.bf16.mxu0 0
    %467 = vmatpush1.bf16.msra.mxu0 0
    %468 = vmatprep.subr.bf16.mxu0 0
    %469 = vmatpush1.bf16.msra.mxu0 0
    %470 = vmatprep.subr.bf16.mxu0 0
    %471 = vmatpush1.bf16.msra.mxu0 0
    %472 = vmatprep.subr.bf16.mxu0 0
    %473 = vmatpush1.bf16.msra.mxu0 0
    %474 = vmatprep.subr.bf16.mxu0 0
    %475 = vmatpush1.bf16.msra.mxu0 0
    %476 = vmatprep.subr.bf16.mxu0 0
    %477 = vmatpush1.bf16.msra.mxu0 0
    %478 = vmatprep.subr.bf16.mxu0 0
    %479 = vmatpush1.bf16.msra.mxu0 0
    %480 = vmatprep.subr.bf16.mxu0 0
    %481 = vmatpush1.bf16.msra.mxu0 0
    %482 = vmatprep.subr.bf16.mxu0 0
    %483 = vmatpush1.bf16.msra.mxu0 0
    %484 = vmatprep.subr.bf16.mxu0 0
    %485 = vmatpush1.bf16.msra.mxu0 0
    %486 = vmatprep.subr.bf16.mxu0 0
    %487 = vmatpush1.bf16.msra.mxu0 0
    %488 = vmatprep.subr.bf16.mxu0 0
    %489 = vmatpush1.bf16.msra.mxu0 0
    %490 = vmatprep.mubr.bf16.mxu0 0
    %491 = vmatmul.mubr.bf16.gmra.mrb[0].mxu0 %v186
    %v492 = vpop.f32.mrb[0].mxu0
    %v493 = vadd.f32 %v444, %v492
    %v494 = vpop.f32.mrb[0].mxu0
    %v495 = vpop.f32.mrb[0].mxu0
    %v496 = vadd.f32 %v444, %v495
    %v497 = vpop.f32.mrb[0].mxu0
    %498 = vdwg.mxu0
    %v499 = vmul.f32 %v427, %v493
    %v500 = vmul.f32 %v430, %v496
    %v501 = vadd.f32 %v365, %v499
    %v502 = vadd.f32 %v366, %v500
    %s503 = scalar_lea.vmem [#allocation7], 48
    %v504 = vld [vmem:[%s503] sm:$0xf]
    %v505 = vld [vmem:[%s503 + $0x4] sm:$0xf]
    %v506 = vld [vmem:[%s503 + $0x8] sm:$0xf]
    %v507 = vld [vmem:[%s503 + $0xc] sm:$0xf]
    %s508 = scalar_lea.vmem %s3, 3
    %v509 = vld [vmem:[%s508] sm:$0x1]
    %v511 = vlaneseq
    %v512 = vshrl.u32 %v511, 7
    %v513 = vsub.s32 0, %v512
    %v514 = vrot.slane %v509, %v513
    %v520 = vunpack.c.l.b16 %v504
    %v521 = vunpack.c.l.b16 %v505
    %v522 = vunpack.c.l.b16 %v506
    %v523 = vunpack.c.l.b16 %v507
    %v524 = vpack.c.b16 %v521, %v520
    %v525 = vpack.c.b16 %v523, %v522
    %528 = vmatprep.subr.bf16.mxu0 0
    %529 = vmatpush1.bf16.msra.mxu0 %v524
    %530 = vmatprep.subr.bf16.mxu0 0
    %531 = vmatpush1.bf16.msra.mxu0 %v525
    %532 = vmatprep.subr.bf16.mxu0 0
    %533 = vmatpush1.bf16.msra.mxu0 0
    %534 = vmatprep.subr.bf16.mxu0 0
    %535 = vmatpush1.bf16.msra.mxu0 0
    %536 = vmatprep.subr.bf16.mxu0 0
    %537 = vmatpush1.bf16.msra.mxu0 0
    %538 = vmatprep.subr.bf16.mxu0 0
    %539 = vmatpush1.bf16.msra.mxu0 0
    %540 = vmatprep.subr.bf16.mxu0 0
    %541 = vmatpush1.bf16.msra.mxu0 0
    %542 = vmatprep.subr.bf16.mxu0 0
    %543 = vmatpush1.bf16.msra.mxu0 0
    %544 = vmatprep.subr.bf16.mxu0 0
    %545 = vmatpush1.bf16.msra.mxu0 0
    %546 = vmatprep.subr.bf16.mxu0 0
    %547 = vmatpush1.bf16.msra.mxu0 0
    %548 = vmatprep.subr.bf16.mxu0 0
    %549 = vmatpush1.bf16.msra.mxu0 0
    %550 = vmatprep.subr.bf16.mxu0 0
    %551 = vmatpush1.bf16.msra.mxu0 0
    %552 = vmatprep.subr.bf16.mxu0 0
    %553 = vmatpush1.bf16.msra.mxu0 0
    %554 = vmatprep.subr.bf16.mxu0 0
    %555 = vmatpush1.bf16.msra.mxu0 0
    %556 = vmatprep.subr.bf16.mxu0 0
    %557 = vmatpush1.bf16.msra.mxu0 0
    %558 = vmatprep.subr.bf16.mxu0 0
    %559 = vmatpush1.bf16.msra.mxu0 0
    %560 = vmatprep.mubr.bf16.mxu0 0
    %561 = vmatmul.mubr.bf16.gmra.mrb[0].mxu0 %v114
    %v562 = vpop.f32.mrb[0].mxu0
    %v563 = vadd.f32 %v514, %v562
    %v564 = vpop.f32.mrb[0].mxu0
    %v565 = vpop.f32.mrb[0].mxu0
    %v566 = vadd.f32 %v514, %v565
    %v567 = vpop.f32.mrb[0].mxu0
    %568 = vdwg.mxu0
    %s569 = scalar_lea.vmem [#allocation8], 48
    %v570 = vld [vmem:[%s569] sm:$0xf]
    %v571 = vld [vmem:[%s569 + $0x4] sm:$0xf]
    %v572 = vld [vmem:[%s569 + $0x8] sm:$0xf]
    %v573 = vld [vmem:[%s569 + $0xc] sm:$0xf]
    %s574 = scalar_lea.vmem %s5, 3
    %v575 = vld [vmem:[%s574] sm:$0x1]
    %v577 = vlaneseq
    %v578 = vshrl.u32 %v577, 7
    %v579 = vsub.s32 0, %v578
    %v580 = vrot.slane %v575, %v579
    %v586 = vunpack.c.l.b16 %v570
    %v587 = vunpack.c.l.b16 %v571
    %v588 = vunpack.c.l.b16 %v572
    %v589 = vunpack.c.l.b16 %v573
    %v590 = vpack.c.b16 %v587, %v586
    %v591 = vpack.c.b16 %v589, %v588
    %594 = vmatprep.subr.bf16.mxu0 0
    %595 = vmatpush1.bf16.msra.mxu0 %v590
    %596 = vmatprep.subr.bf16.mxu0 0
    %597 = vmatpush1.bf16.msra.mxu0 %v591
    %598 = vmatprep.subr.bf16.mxu0 0
    %599 = vmatpush1.bf16.msra.mxu0 0
    %600 = vmatprep.subr.bf16.mxu0 0
    %601 = vmatpush1.bf16.msra.mxu0 0
    %602 = vmatprep.subr.bf16.mxu0 0
    %603 = vmatpush1.bf16.msra.mxu0 0
    %604 = vmatprep.subr.bf16.mxu0 0
    %605 = vmatpush1.bf16.msra.mxu0 0
    %606 = vmatprep.subr.bf16.mxu0 0
    %607 = vmatpush1.bf16.msra.mxu0 0
    %608 = vmatprep.subr.bf16.mxu0 0
    %609 = vmatpush1.bf16.msra.mxu0 0
    %610 = vmatprep.subr.bf16.mxu0 0
    %611 = vmatpush1.bf16.msra.mxu0 0
    %612 = vmatprep.subr.bf16.mxu0 0
    %613 = vmatpush1.bf16.msra.mxu0 0
    %614 = vmatprep.subr.bf16.mxu0 0
    %615 = vmatpush1.bf16.msra.mxu0 0
    %616 = vmatprep.subr.bf16.mxu0 0
    %617 = vmatpush1.bf16.msra.mxu0 0
    %618 = vmatprep.subr.bf16.mxu0 0
    %619 = vmatpush1.bf16.msra.mxu0 0
    %620 = vmatprep.subr.bf16.mxu0 0
    %621 = vmatpush1.bf16.msra.mxu0 0
    %622 = vmatprep.subr.bf16.mxu0 0
    %623 = vmatpush1.bf16.msra.mxu0 0
    %624 = vmatprep.subr.bf16.mxu0 0
    %625 = vmatpush1.bf16.msra.mxu0 0
    %626 = vmatprep.mubr.bf16.mxu0 0
    %627 = vmatmul.mubr.bf16.gmra.mrb[0].mxu0 %v186
    %v628 = vpop.f32.mrb[0].mxu0
    %v629 = vadd.f32 %v580, %v628
    %v630 = vpop.f32.mrb[0].mxu0
    %v631 = vpop.f32.mrb[0].mxu0
    %v632 = vadd.f32 %v580, %v631
    %v633 = vpop.f32.mrb[0].mxu0
    %634 = vdwg.mxu0
    %v635 = vmul.f32 %v563, %v629
    %v636 = vmul.f32 %v566, %v632
    %v637 = vadd.f32 %v501, %v635
    %v638 = vadd.f32 %v502, %v636
    %s639 = scalar_lea.vmem [#allocation7], 64
    %v640 = vld [vmem:[%s639] sm:$0xf]
    %v641 = vld [vmem:[%s639 + $0x4] sm:$0xf]
    %v642 = vld [vmem:[%s639 + $0x8] sm:$0xf]
    %v643 = vld [vmem:[%s639 + $0xc] sm:$0xf]
    %s644 = scalar_lea.vmem %s3, 4
    %v645 = vld [vmem:[%s644] sm:$0x1]
    %v647 = vlaneseq
    %v648 = vshrl.u32 %v647, 7
    %v649 = vsub.s32 0, %v648
    %v650 = vrot.slane %v645, %v649
    %v656 = vunpack.c.l.b16 %v640
    %v657 = vunpack.c.l.b16 %v641
    %v658 = vunpack.c.l.b16 %v642
    %v659 = vunpack.c.l.b16 %v643
    %v660 = vpack.c.b16 %v657, %v656
    %v661 = vpack.c.b16 %v659, %v658
    %664 = vmatprep.subr.bf16.mxu0 0
    %665 = vmatpush1.bf16.msra.mxu0 %v660
    %666 = vmatprep.subr.bf16.mxu0 0
    %667 = vmatpush1.bf16.msra.mxu0 %v661
    %668 = vmatprep.subr.bf16.mxu0 0
    %669 = vmatpush1.bf16.msra.mxu0 0
    %670 = vmatprep.subr.bf16.mxu0 0
    %671 = vmatpush1.bf16.msra.mxu0 0
    %672 = vmatprep.subr.bf16.mxu0 0
    %673 = vmatpush1.bf16.msra.mxu0 0
    %674 = vmatprep.subr.bf16.mxu0 0
    %675 = vmatpush1.bf16.msra.mxu0 0
    %676 = vmatprep.subr.bf16.mxu0 0
    %677 = vmatpush1.bf16.msra.mxu0 0
    %678 = vmatprep.subr.bf16.mxu0 0
    %679 = vmatpush1.bf16.msra.mxu0 0
    %680 = vmatprep.subr.bf16.mxu0 0
    %681 = vmatpush1.bf16.msra.mxu0 0
    %682 = vmatprep.subr.bf16.mxu0 0
    %683 = vmatpush1.bf16.msra.mxu0 0
    %684 = vmatprep.subr.bf16.mxu0 0
    %685 = vmatpush1.bf16.msra.mxu0 0
    %686 = vmatprep.subr.bf16.mxu0 0
    %687 = vmatpush1.bf16.msra.mxu0 0
    %688 = vmatprep.subr.bf16.mxu0 0
    %689 = vmatpush1.bf16.msra.mxu0 0
    %690 = vmatprep.subr.bf16.mxu0 0
    %691 = vmatpush1.bf16.msra.mxu0 0
    %692 = vmatprep.subr.bf16.mxu0 0
    %693 = vmatpush1.bf16.msra.mxu0 0
    %694 = vmatprep.subr.bf16.mxu0 0
    %695 = vmatpush1.bf16.msra.mxu0 0
    %696 = vmatprep.mubr.bf16.mxu0 0
    %697 = vmatmul.mubr.bf16.gmra.mrb[0].mxu0 %v114
    %v698 = vpop.f32.mrb[0].mxu0
    %v699 = vadd.f32 %v650, %v698
    %v700 = vpop.f32.mrb[0].mxu0
    %v701 = vpop.f32.mrb[0].mxu0
    %v702 = vadd.f32 %v650, %v701
    %v703 = vpop.f32.mrb[0].mxu0
    %704 = vdwg.mxu0
    %s705 = scalar_lea.vmem [#allocation8], 64
    %v706 = vld [vmem:[%s705] sm:$0xf]
    %v707 = vld [vmem:[%s705 + $0x4] sm:$0xf]
    %v708 = vld [vmem:[%s705 + $0x8] sm:$0xf]
    %v709 = vld [vmem:[%s705 + $0xc] sm:$0xf]
    %s710 = scalar_lea.vmem %s5, 4
    %v711 = vld [vmem:[%s710] sm:$0x1]
    %v713 = vlaneseq
    %v714 = vshrl.u32 %v713, 7
    %v715 = vsub.s32 0, %v714
    %v716 = vrot.slane %v711, %v715
    %v722 = vunpack.c.l.b16 %v706
    %v723 = vunpack.c.l.b16 %v707
    %v724 = vunpack.c.l.b16 %v708
    %v725 = vunpack.c.l.b16 %v709
    %v726 = vpack.c.b16 %v723, %v722
    %v727 = vpack.c.b16 %v725, %v724
    %730 = vmatprep.subr.bf16.mxu0 0
    %731 = vmatpush1.bf16.msra.mxu0 %v726
    %732 = vmatprep.subr.bf16.mxu0 0
    %733 = vmatpush1.bf16.msra.mxu0 %v727
    %734 = vmatprep.subr.bf16.mxu0 0
    %735 = vmatpush1.bf16.msra.mxu0 0
    %736 = vmatprep.subr.bf16.mxu0 0
    %737 = vmatpush1.bf16.msra.mxu0 0
    %738 = vmatprep.subr.bf16.mxu0 0
    %739 = vmatpush1.bf16.msra.mxu0 0
    %740 = vmatprep.subr.bf16.mxu0 0
    %741 = vmatpush1.bf16.msra.mxu0 0
    %742 = vmatprep.subr.bf16.mxu0 0
    %743 = vmatpush1.bf16.msra.mxu0 0
    %744 = vmatprep.subr.bf16.mxu0 0
    %745 = vmatpush1.bf16.msra.mxu0 0
    %746 = vmatprep.subr.bf16.mxu0 0
    %747 = vmatpush1.bf16.msra.mxu0 0
    %748 = vmatprep.subr.bf16.mxu0 0
    %749 = vmatpush1.bf16.msra.mxu0 0
    %750 = vmatprep.subr.bf16.mxu0 0
    %751 = vmatpush1.bf16.msra.mxu0 0
    %752 = vmatprep.subr.bf16.mxu0 0
    %753 = vmatpush1.bf16.msra.mxu0 0
    %754 = vmatprep.subr.bf16.mxu0 0
    %755 = vmatpush1.bf16.msra.mxu0 0
    %756 = vmatprep.subr.bf16.mxu0 0
    %757 = vmatpush1.bf16.msra.mxu0 0
    %758 = vmatprep.subr.bf16.mxu0 0
    %759 = vmatpush1.bf16.msra.mxu0 0
    %760 = vmatprep.subr.bf16.mxu0 0
    %761 = vmatpush1.bf16.msra.mxu0 0
    %762 = vmatprep.mubr.bf16.mxu0 0
    %763 = vmatmul.mubr.bf16.gmra.mrb[0].mxu0 %v186
    %v764 = vpop.f32.mrb[0].mxu0
    %v765 = vadd.f32 %v716, %v764
    %v766 = vpop.f32.mrb[0].mxu0
    %v767 = vpop.f32.mrb[0].mxu0
    %v768 = vadd.f32 %v716, %v767
    %v769 = vpop.f32.mrb[0].mxu0
    %770 = vdwg.mxu0
    %v771 = vmul.f32 %v699, %v765
    %v772 = vmul.f32 %v702, %v768
    %v773 = vadd.f32 %v637, %v771
    %v774 = vadd.f32 %v638, %v772
    %v775 = vand.u32 2147483647, %v773
    %v776 = vand.u32 2147483647, %v774
    %v777 = vrsqrt.pop %v775
    %v778 = vmul.f32 %v775, %v777
    %vm779 = vcmp.eq.f32.partialorder %v775, inf
    %v780 = vsel %vm779, %v775, %v778
    %vm781 = vcmp.eq.f32.partialorder %v775, 0.0
    %v782 = vand.u32 %v775, 2147483648
    %v783 = vsel %vm781, %v782, %v780
    %v784 = vrsqrt.pop %v776
    %v785 = vmul.f32 %v776, %v784
    %vm786 = vcmp.eq.f32.partialorder %v776, inf
    %v787 = vsel %vm786, %v776, %v785
    %vm788 = vcmp.eq.f32.partialorder %v776, 0.0
    %v789 = vand.u32 %v776, 2147483648
    %v790 = vsel %vm788, %v789, %v787
    %vm791 = vcmp.ge.f32.partialorder %v773, 0.0
    %vm792 = vcmp.ge.f32.partialorder %v774, 0.0
    %v793 = vsub.f32 0.0, %v783
    %v794 = vsub.f32 0.0, %v790
    %v795 = vsel %vm791, %v783, %v793
    %v796 = vsel %vm792, %v790, %v794
    %797 = vadd.xlane.f32.xlu0 %v775
    %v798 = vpop.xlane.xlu0 %797
    %799 = vadd.xlane.f32.xlu0 %v776
    %v800 = vpop.xlane.xlu0 %799
    %v801 = vmax.f32 %v798, 1e-24
    %v802 = vmax.f32 %v800, 1e-24
    %v803 = vrsqrt.pop %v801
    %v804 = vrsqrt.pop %v802
    %v805 = vmul.f32 %v795, %v803
    %v806 = vmul.f32 %v796, %v804
    %807 = vst [vmem:[#allocation10] sm:$0xff] %v805
    %808 = vst [vmem:[#allocation10 + $0x8] sm:$0xff] %v806
    // Predicated region
    $region42: #{tpu_custom_call.1} parent=1 // pred_check
      _
    $region43: #{tpu_custom_call.1} parent=1 // pred_check_branch
      %810 = sbr.rel (0) target = $region45
    $region44: #{tpu_custom_call.1} parent=1 // pred_region
      %s812 = ssub.s32 256, 256
      %813 = vsyncadd [#allocation4], %s812
      %s814 = sshll.u32 [#allocation10], 4
      %s815 = int_to_ptr.vmem [resolvable:$true] %s814
      %820 = dma.vmem_to_hbm [thread:$0]  %s815, 256, %s6, [#allocation4], 128, 128, 8
    $region45: #{tpu_custom_call.1} parent=1 // pred_fallthru
      _
    // Predicated region
    $region46: #{tpu_custom_call.1} parent=1 // pred_check
      _
    $region47: #{tpu_custom_call.1} parent=1 // pred_check_branch
      %822 = sbr.rel (0) target = $region49
    $region48: #{tpu_custom_call.1} parent=1 // pred_region
      %823 = dma.done [#allocation4], 256
    $region49: #{tpu_custom_call.1} parent=1 // pred_fallthru
      _
    %824 = vsyncpa [#allocation3], 1
    %825 = vsyncpa [#allocation6], 1
    %826 = vsyncpa [#allocation9], 1
    %827 = vsyncpa [#allocation4], 1

</llo_original>
